<compile_context>
chip_gen: v7x
topology: tpu7x:2x2x1
jax: 0.10.0
libtpu: 0.0.40
codegen_flags: <defaults>
</compile_context>

<pallas_src>
import math
import functools

import jax
import jax.numpy as jnp
from jax import lax
from jax.experimental import pallas as pl
from jax.experimental.pallas import tpu as pltpu


_MASK_VALUE = -1e30               # large finite negative (robust vs -inf NaNs)
_VMEM_LIMIT = 64 * 1024 * 1024    # scoped-VMEM cap; fits every generation


def _round_up(x, m):
    return ((x + m - 1) // m) * m


def _divisor_tile(n, target, step):
    """Largest multiple of `step` <= target that divides n; n itself if none."""
    if n <= target:
        return n
    t = (target // step) * step
    while t >= step:
        if n % t == 0:
            return t
        t -= step
    return n


# ---------------------------------------------------------------------------
# Weight prep (hoisted out of the per-call path — do this once per parameter set)
# ---------------------------------------------------------------------------
def fuse_qkv_weights(w_query, w_key, w_value, *, compute_dtype=jnp.bfloat16):
    """Fuse nn.Linear weights (d_out, d_in) -> (d_in, 3*d_out).

    The 1/sqrt(d_out) softmax scale is folded into the query columns and the
    result is cast to the MXU compute dtype, so the per-forward wrapper does
    zero weight-side work.
    """
    d_out = w_query.shape[0]
    scale = 1.0 / math.sqrt(d_out)
    w_fused = jnp.concatenate([w_query * scale, w_key, w_value], axis=0).T
    if compute_dtype is not None:
        w_fused = w_fused.astype(compute_dtype)
    return w_fused


# ---------------------------------------------------------------------------
# Kernel 1: fused QKV projection (one lane-dense (tm, 3*d_out) output tile)
# ---------------------------------------------------------------------------
def _qkv_proj_kernel(x_ref, w_ref, qkv_ref, acc_ref):
    @pl.when(pl.program_id(2) == 0)
    def _init():
        acc_ref[...] = jnp.zeros(acc_ref.shape, jnp.float32)

    # Cast the activation tile to the weight dtype (bf16) in-kernel: no extra
    # XLA pass over x in HBM; native MXU dtype; f32 accumulation.
    acc_ref[...] += jnp.dot(x_ref[...].astype(w_ref.dtype), w_ref[...],
                            preferred_element_type=jnp.float32)

    @pl.when(pl.program_id(2) == pl.num_programs(2) - 1)
    def _store():
        qkv_ref[...] = acc_ref[...].astype(qkv_ref.dtype)


# ---------------------------------------------------------------------------
# Kernel 2: flash attention over a flattened lower-triangular kv schedule
# ---------------------------------------------------------------------------
def _flash_attn_kernel(qi_ref, ki_ref, q_ref, k_ref, v_ref, o_ref,
                       m_sc, l_sc, acc_sc, *, blk):
    step = pl.program_id(1)
    qi = qi_ref[step]          # query-block index for this step (SMEM scalar)
    ki = ki_ref[step]          # kv-block index for this step (ki <= qi always)

    @pl.when(ki == 0)
    def _init():
        m_sc[...] = jnp.full(m_sc.shape, -jnp.inf, jnp.float32)
        l_sc[...] = jnp.zeros(l_sc.shape, jnp.float32)
        acc_sc[...] = jnp.zeros(acc_sc.shape, jnp.float32)

    # q @ k.T without an in-kernel transpose (contract the last dims); the
    # 1/sqrt(d) scale is already folded into the query weights.
    s = lax.dot_general(q_ref[0], k_ref[0], (((1,), (1,)), ((), ())),
                        preferred_element_type=jnp.float32)

    # Single causal mask with global indices, emitted once for all blocks.
    # It is a no-op on strictly-below-diagonal blocks and also masks the
    # zero-padded kv columns (col >= T > row for every real query row).
    row = qi * blk + lax.broadcasted_iota(jnp.int32, (blk, blk), 0)
    col = ki * blk + lax.broadcasted_iota(jnp.int32, (blk, blk), 1)
    s = jnp.where(col > row, _MASK_VALUE, s)

    # Online softmax; f32 running stats / accumulator in VMEM scratch.
    m_prev = m_sc[...]
    m_new = jnp.maximum(m_prev, jnp.max(s, axis=-1, keepdims=True))
    alpha = jnp.exp(m_prev - m_new)
    p = jnp.exp(s - m_new)
    l_sc[...] = alpha * l_sc[...] + jnp.sum(p, axis=-1, keepdims=True)
    acc_sc[...] = alpha * acc_sc[...] + jnp.dot(
        p.astype(v_ref.dtype), v_ref[0], preferred_element_type=jnp.float32)
    m_sc[...] = m_new

    # The diagonal block is always the LAST kv step for this q block.
    @pl.when(ki == qi)
    def _finalize():
        inv_l = pl.reciprocal(l_sc[...], approx=True)        # EUP slot, ~free
        o_ref[0] = (acc_sc[...] * inv_l).astype(o_ref.dtype)


# ---------------------------------------------------------------------------
# Wrapper
# ---------------------------------------------------------------------------
def causal_self_attention(x, w_fused, d_out, *, block_q=512,
                          compute_dtype=jnp.bfloat16):
    """x: (B, T, d_in); w_fused: (d_in, 3*d_out) from fuse_qkv_weights()."""
    B, T, d_in = x.shape
    assert w_fused.shape == (d_in, 3 * d_out)

    # Attention tile & padded sequence length.  block_q=512 sits in the sweet
    # spot for the 128 MiB-VMEM parts (v5e/v6e) and within the 256-512 budget
    # recommended for v7x's 64 MiB VMEM.
    blk = min(block_q, _round_up(T, 8))
    T_pad = _round_up(T, blk)
    nblk = T_pad // blk

    qkv_dtype = (compute_dtype if (compute_dtype is not None
                                   and x.dtype == jnp.float32) else x.dtype)

    # ---- fused QKV projection: (B*T_pad, d_in) @ (d_in, 3*d_out) -----------
    rows = B * T_pad
    tm = min(256, _round_up(rows, 8))
    rows_pad = _round_up(rows, tm)
    n_total = 3 * d_out
    tn = _divisor_tile(n_total, 1024, 256)   # bound weight residency; lane-dense
    tk = _divisor_tile(d_in, 2048, 256)

    x_p = x
    if T_pad != T:
        x_p = jnp.pad(x, ((0, 0), (0, T_pad - T), (0, 0)))
    x2d = x_p.reshape(rows, d_in)
    if rows_pad != rows:
        x2d = jnp.pad(x2d, ((0, rows_pad - rows), (0, 0)))

    qkv = pl.pallas_call(
        _qkv_proj_kernel,
        out_shape=jax.ShapeDtypeStruct((rows_pad, n_total), qkv_dtype),
        grid_spec=pltpu.PrefetchScalarGridSpec(
            num_scalar_prefetch=0,
            grid=(rows_pad // tm, n_total // tn, d_in // tk),
            in_specs=[
                pl.BlockSpec((tm, tk), lambda i, j, kk: (i, kk)),
                pl.BlockSpec((tk, tn), lambda i, j, kk: (kk, j)),
            ],
            out_specs=pl.BlockSpec((tm, tn), lambda i, j, kk: (i, j)),
            scratch_shapes=[pltpu.VMEM((tm, tn), jnp.float32)],
        ),
        compiler_params=pltpu.CompilerParams(
            dimension_semantics=("parallel", "parallel", "arbitrary"),
            vmem_limit_bytes=_VMEM_LIMIT),
    )(x2d, w_fused)

    # Cheap lane-dense XLA slices in the wrapper (not in-kernel sub-128 splits).
    qkv = qkv[:rows]
    q = qkv[:, :d_out].reshape(B, T_pad, d_out)
    k = qkv[:, d_out:2 * d_out].reshape(B, T_pad, d_out)
    v = qkv[:, 2 * d_out:].reshape(B, T_pad, d_out)

    # ---- flash attention over the flattened lower-triangular schedule ------
    tri_qi, tri_ki = [], []
    for q_i in range(nblk):
        for k_i in range(q_i + 1):
            tri_qi.append(q_i)
            tri_ki.append(k_i)
    n_steps = len(tri_qi)                       # nblk*(nblk+1)//2 steps only
    qi_tab = jnp.array(tri_qi, dtype=jnp.int32)
    ki_tab = jnp.array(tri_ki, dtype=jnp.int32)

    out = pl.pallas_call(
        functools.partial(_flash_attn_kernel, blk=blk),
        out_shape=jax.ShapeDtypeStruct((B, T_pad, d_out), x.dtype),
        grid_spec=pltpu.PrefetchScalarGridSpec(
            num_scalar_prefetch=2,              # step->qi, step->ki tables
            grid=(B, n_steps),
            in_specs=[
                pl.BlockSpec((1, blk, d_out),
                             lambda b, s, qi, ki: (b, qi[s], 0)),   # Q
                pl.BlockSpec((1, blk, d_out),
                             lambda b, s, qi, ki: (b, ki[s], 0)),   # K
                pl.BlockSpec((1, blk, d_out),
                             lambda b, s, qi, ki: (b, ki[s], 0)),   # V
            ],
            out_specs=pl.BlockSpec((1, blk, d_out),
                                   lambda b, s, qi, ki: (b, qi[s], 0)),
            scratch_shapes=[
                pltpu.VMEM((blk, 1), jnp.float32),      # running max m
                pltpu.VMEM((blk, 1), jnp.float32),      # running denom l
                pltpu.VMEM((blk, d_out), jnp.float32),  # output accumulator
            ],
        ),
        compiler_params=pltpu.CompilerParams(
            dimension_semantics=("parallel", "arbitrary"),
            vmem_limit_bytes=_VMEM_LIMIT),
    )(qi_tab, ki_tab, q, k, v)

    return out[:, :T, :] if T_pad != T else out


# ---------------------------------------------------------------------------
# Pure-JAX reference (matches the PyTorch forward, eval mode)
# ---------------------------------------------------------------------------
def _reference(x, w_query, w_key, w_value):
    q = jnp.einsum("btd,od->bto", x, w_query)
    k = jnp.einsum("btd,od->bto", x, w_key)
    v = jnp.einsum("btd,od->bto", x, w_value)
    scores = jnp.einsum("bqo,bko->bqk", q, k)
    T = x.shape[1]
    mask = jnp.triu(jnp.ones((T, T), dtype=bool), k=1)
    scores = jnp.where(mask[None], -jnp.inf, scores)
    d_k = q.shape[-1]
    w = jax.nn.softmax(scores / math.sqrt(d_k), axis=-1)
    return jnp.einsum("bqk,bko->bqo", w, v)


if __name__ == "__main__":
    key = jax.random.PRNGKey(0)
    B, T, d_in, d_out = 2, 8, 32, 32  # context_length = T = 8, dropout = 0.0

    kx, kq, kk, kv = jax.random.split(key, 4)
    x = jax.random.normal(kx, (B, T, d_in), dtype=jnp.float32)
    # nn.Linear default init: uniform(-1/sqrt(d_in), 1/sqrt(d_in)), shape (d_out, d_in)
    bound = 1.0 / math.sqrt(d_in)
    w_query = jax.random.uniform(kq, (d_out, d_in), jnp.float32, -bound, bound)
    w_key = jax.random.uniform(kk, (d_out, d_in), jnp.float32, -bound, bound)
    w_value = jax.random.uniform(kv, (d_out, d_in), jnp.float32, -bound, bound)

    # Hoisted weight prep (scale fold + fuse + transpose + bf16 cast): once.
    w_fused = fuse_qkv_weights(w_query, w_key, w_value)

    out = causal_self_attention(x, w_fused, d_out)
    out = jax.block_until_ready(out)

    ref = _reference(x, w_query, w_key, w_value)
    assert out.shape == (B, T, d_out)
    # bf16 MXU matmuls (f32 accumulation) + approx reciprocal + online-softmax
    # accumulation order -> loosened tolerance vs the f32 reference.
    assert jnp.allclose(out, ref, atol=2e-2, rtol=2e-2), "mismatch vs reference"

    print("KERNEL_OK")
</pallas_src>

<mosaic_0001>
module attributes {stable_mosaic.version = 11 : i64} {
  func.func @_qkv_proj_kernel(%arg0: i32, %arg1: i32, %arg2: i32, %arg3: memref<16x32xf32, #tpu.memory_space<vmem>>, %arg4: memref<32x96xbf16, #tpu.memory_space<vmem>>, %arg5: memref<16x96xbf16, #tpu.memory_space<vmem>>, %arg6: memref<16x96xf32, #tpu.memory_space<vmem>>) attributes {dimension_semantics = [#tpu.dimension_semantics<parallel>, #tpu.dimension_semantics<parallel>, #tpu.dimension_semantics<arbitrary>], iteration_bounds = array<i64: 1, 1, 1>, scalar_prefetch = 0 : i64, scratch_operands = 1 : i64, tpu.core_type = #tpu.core_type<tc>, window_params = [{transform_indices = @transform_0, window_bounds = array<i64: 16, 32>}, {transform_indices = @transform_1, window_bounds = array<i64: 32, 96>}, {transform_indices = @transform_2, window_bounds = array<i64: 16, 96>}]} {
    %c0_i32 = arith.constant 0 : i32
    %0 = arith.cmpi eq, %arg2, %c0_i32 : i32
    %1 = arith.extui %0 : i1 to i32
    %c0_i32_0 = arith.constant 0 : i32
    %2 = arith.cmpi ne, %1, %c0_i32_0 : i32
    scf.if %2 {
      %cst_10 = arith.constant 0.000000e+00 : f32
      %13 = vector.broadcast %cst_10 : f32 to vector<16x96xf32>
      %c0_11 = arith.constant 0 : index
      %c0_12 = arith.constant 0 : index
      %14 = vector.load %arg6[%c0_11, %c0_12] : memref<16x96xf32, #tpu.memory_space<vmem>>, vector<16x96xf32>
      tpu.vector_store %arg6[%c0_11, %c0_12], %13 {strides = array<i32>} : memref<16x96xf32, #tpu.memory_space<vmem>>, vector<16x96xf32>,
    } else {
    }
    %c0 = arith.constant 0 : index
    %c0_1 = arith.constant 0 : index
    %3 = vector.load %arg6[%c0, %c0_1] : memref<16x96xf32, #tpu.memory_space<vmem>>, vector<16x96xf32>
    %c0_2 = arith.constant 0 : index
    %c0_3 = arith.constant 0 : index
    %4 = vector.load %arg3[%c0_2, %c0_3] : memref<16x32xf32, #tpu.memory_space<vmem>>, vector<16x32xf32>
    %5 = arith.truncf %4 : vector<16x32xf32> to vector<16x32xbf16>
    %c0_4 = arith.constant 0 : index
    %c0_5 = arith.constant 0 : index
    %6 = vector.load %arg4[%c0_4, %c0_5] : memref<32x96xbf16, #tpu.memory_space<vmem>>, vector<32x96xbf16>
    %cst = arith.constant dense<0.000000e+00> : vector<16x96xf32>
    %7 = tpu.matmul %5, %6, %cst {dimension_numbers = #tpu.dot_dimension_numbers<[1], [0], [0], [1], [0, 0, 1, 1], [], []>} : vector<16x32xbf16>, vector<32x96xbf16>, vector<16x96xf32> -> vector<16x96xf32>
    %8 = arith.addf %3, %7 : vector<16x96xf32>
    %c0_6 = arith.constant 0 : index
    %c0_7 = arith.constant 0 : index
    %9 = vector.load %arg6[%c0_6, %c0_7] : memref<16x96xf32, #tpu.memory_space<vmem>>, vector<16x96xf32>
    tpu.vector_store %arg6[%c0_6, %c0_7], %8 {strides = array<i32>} : memref<16x96xf32, #tpu.memory_space<vmem>>, vector<16x96xf32>,
    %c0_i32_8 = arith.constant 0 : i32
    %10 = arith.cmpi eq, %arg2, %c0_i32_8 : i32
    %11 = arith.extui %10 : i1 to i32
    %c0_i32_9 = arith.constant 0 : i32
    %12 = arith.cmpi ne, %11, %c0_i32_9 : i32
    scf.if %12 {
      %c0_10 = arith.constant 0 : index
      %c0_11 = arith.constant 0 : index
      %13 = vector.load %arg6[%c0_10, %c0_11] : memref<16x96xf32, #tpu.memory_space<vmem>>, vector<16x96xf32>
      %14 = arith.truncf %13 : vector<16x96xf32> to vector<16x96xbf16>
      %c0_12 = arith.constant 0 : index
      %c0_13 = arith.constant 0 : index
      %15 = vector.load %arg5[%c0_12, %c0_13] : memref<16x96xbf16, #tpu.memory_space<vmem>>, vector<16x96xbf16>
      tpu.vector_store %arg5[%c0_12, %c0_13], %14 {strides = array<i32>} : memref<16x96xbf16, #tpu.memory_space<vmem>>, vector<16x96xbf16>,
    } else {
    }
    return
  }
  func.func @transform_0(%arg0: i32, %arg1: i32, %arg2: i32) -> (i32, i32) {
    %c0_i32 = arith.constant 0 : i32
    return %arg0, %arg2 : i32, i32
  }
  func.func @transform_1(%arg0: i32, %arg1: i32, %arg2: i32) -> (i32, i32) {
    %c0_i32 = arith.constant 0 : i32
    return %arg2, %arg1 : i32, i32
  }
  func.func @transform_2(%arg0: i32, %arg1: i32, %arg2: i32) -> (i32, i32) {
    %c0_i32 = arith.constant 0 : i32
    return %arg0, %arg1 : i32, i32
  }
}

</mosaic_0001>

<llo_original>
// kernel: tpu_custom_call.1
$region0: #{tpu_custom_call.1}
  #allocation0 [shape = 'u32[]', space=smem, size = 0x4, offset = 0x4, fixed_abs, tag = 'smem constant byte address 0x4 - core index']
  #allocation1 [shape = 'u32[144,128]{1,0:T(1,128)}', space=vmem, size = 0x12000, scoped, tag = 'internal scratch']
  #allocation2 [shape = 'f32[16,96]{1,0:T(8,128)}', space=vmem, size = 0x2000, scoped, tag = 'scratch operand']
  %s0 = inlined_call_operand.hbm [shape: f32[16,32], index: 0, kind: input, shape index: {}]
  %s1 = inlined_call_operand.hbm [shape: bf16[32,96], index: 1, kind: input, shape index: {}]
  %s2 = inlined_call_operand.hbm [shape: bf16[16,96], index: 2, kind: output, shape index: {}]
  %s3 = sld [smem:[#allocation0]]
  $region34: #{tpu_custom_call.1} parent=0
    _
  %s5 = ssub.s32 1, %s3
  %s6 = scalar_select 0, %s5, %s3
  $region1: #{tpu_custom_call.1} parent=0
    #allocation3 [shape = 'u8[8192]{0}', space=vmem, size = 0x2000, scoped, tag = 'input window, operand 0, single buffered']
    #allocation4 [shape = 's32[1]{0}', space=sflag, size = 0x4, scoped, tag = 'scoped memory for tpu_custom_call.1']
    #allocation5 [shape = 's32[1]{0}', space=sflag, size = 0x4, scoped, tag = 'scoped memory for tpu_custom_call.1']
    #allocation6 [shape = 'u8[8192]{0}', space=vmem, size = 0x2000, scoped, tag = 'input window, operand 1, single buffered']
    #allocation7 [shape = 's32[1]{0}', space=sflag, size = 0x4, scoped, tag = 'scoped memory for tpu_custom_call.1']
    #allocation8 [shape = 'u8[4096]{0}', space=vmem, size = 0x1000, scoped, tag = 'output window, operand 0, single buffered']
    %7 = vsyncpa [#allocation4], 0
    %8 = vsyncpa [#allocation7], 0
    %9 = vsyncpa [#allocation5], 0
    // Predicated region
    $region2: #{tpu_custom_call.1} parent=1 // pred_check
      _
    $region3: #{tpu_custom_call.1} parent=1 // pred_check_branch
      %11 = sbr.rel (0) target = $region5
    $region4: #{tpu_custom_call.1} parent=1 // pred_region
      %s13 = ssub.s32 256, 256
      %14 = vsyncadd [#allocation4], %s13
      %s15 = sshll.u32 [#allocation3], 4
      %s16 = int_to_ptr.vmem [resolvable:$true] %s15
      %21 = dma.hbm_to_vmem [thread:$0]  %s0, 256, %s16, [#allocation4], 128, 128, 8
    $region5: #{tpu_custom_call.1} parent=1 // pred_fallthru
      _
    // Predicated region
    $region6: #{tpu_custom_call.1} parent=1 // pred_check
      _
    $region7: #{tpu_custom_call.1} parent=1 // pred_check_branch
      %23 = sbr.rel (0) target = $region9
    $region8: #{tpu_custom_call.1} parent=1 // pred_region
      %s25 = ssub.s32 256, 256
      %26 = vsyncadd [#allocation7], %s25
      %s27 = sshll.u32 [#allocation6], 4
      %s28 = int_to_ptr.vmem [resolvable:$true] %s27
      %33 = dma.hbm_to_vmem [thread:$0]  %s1, 256, %s28, [#allocation7], 64, 64, 4
    $region9: #{tpu_custom_call.1} parent=1 // pred_fallthru
      _
    // Predicated region
    $region10: #{tpu_custom_call.1} parent=1 // pred_check
      _
    $region11: #{tpu_custom_call.1} parent=1 // pred_check_branch
      %35 = sbr.rel (0) target = $region13
    $region12: #{tpu_custom_call.1} parent=1 // pred_region
      %36 = dma.done [#allocation4], 256
    $region13: #{tpu_custom_call.1} parent=1 // pred_fallthru
      _
    // Predicated region
    $region14: #{tpu_custom_call.1} parent=1 // pred_check
      _
    $region15: #{tpu_custom_call.1} parent=1 // pred_check_branch
      %38 = sbr.rel (0) target = $region17
    $region16: #{tpu_custom_call.1} parent=1 // pred_region
      %39 = dma.done [#allocation7], 256
    $region17: #{tpu_custom_call.1} parent=1 // pred_fallthru
      _
    %p41 = scmp.eq.s32.totalorder 0, 0
    // Predicated region
    $region18: #{tpu_custom_call.1} parent=1 // pred_check
      %p42 = pneg %p41
    $region19: #{tpu_custom_call.1} parent=1 // pred_check_branch
      %44 = sbr.rel (%p42) target = $region21
    $region20: #{tpu_custom_call.1} parent=1 // pred_region
      %vm45 = vcmask 785408
      %46 = vst.msk [vmem:[#allocation2] sm:$0xff] %vm45, 0.0
      %47 = vst.msk [vmem:[#allocation2 + $0x8] sm:$0xff] %vm45, 0.0
    $region21: #{tpu_custom_call.1} parent=1 // pred_fallthru
      _
    %v48 = vld [vmem:[#allocation2] sm:$0xff]
    %v49 = vld [vmem:[#allocation2 + $0x8] sm:$0xff]
    %v50 = vld [vmem:[#allocation3] sm:$0xff]
    %v51 = vld [vmem:[#allocation3 + $0x8] sm:$0xff]
    %v52 = vpack.c.bf16 %v51, %v50
    %v53 = vld [vmem:[#allocation6] sm:$0xf]
    %v54 = vld [vmem:[#allocation6 + $0x4] sm:$0xf]
    %v55 = vld [vmem:[#allocation6 + $0x8] sm:$0xf]
    %v56 = vld [vmem:[#allocation6 + $0xc] sm:$0xf]
    %v61 = vunpack.c.l.b16 %v53
    %v62 = vunpack.c.l.b16 %v54
    %v63 = vunpack.c.l.b16 %v55
    %v64 = vunpack.c.l.b16 %v56
    %v65 = vpack.c.b16 %v62, %v61
    %v66 = vpack.c.b16 %v64, %v63
    %vm69 = vcmask 261120
    %v71 = vsel %vm69, %v52, 0
    %73 = vmatprep.subr.bf16.mxu0 0
    %74 = vmatpush1.bf16.msra.mxu0 %v65
    %75 = vmatprep.subr.bf16.mxu0 0
    %76 = vmatpush1.bf16.msra.mxu0 %v66
    %77 = vmatprep.subr.bf16.mxu0 0
    %78 = vmatpush1.bf16.msra.mxu0 0
    %79 = vmatprep.subr.bf16.mxu0 0
    %80 = vmatpush1.bf16.msra.mxu0 0
    %81 = vmatprep.subr.bf16.mxu0 0
    %82 = vmatpush1.bf16.msra.mxu0 0
    %83 = vmatprep.subr.bf16.mxu0 0
    %84 = vmatpush1.bf16.msra.mxu0 0
    %85 = vmatprep.subr.bf16.mxu0 0
    %86 = vmatpush1.bf16.msra.mxu0 0
    %87 = vmatprep.subr.bf16.mxu0 0
    %88 = vmatpush1.bf16.msra.mxu0 0
    %89 = vmatprep.subr.bf16.mxu0 0
    %90 = vmatpush1.bf16.msra.mxu0 0
    %91 = vmatprep.subr.bf16.mxu0 0
    %92 = vmatpush1.bf16.msra.mxu0 0
    %93 = vmatprep.subr.bf16.mxu0 0
    %94 = vmatpush1.bf16.msra.mxu0 0
    %95 = vmatprep.subr.bf16.mxu0 0
    %96 = vmatpush1.bf16.msra.mxu0 0
    %97 = vmatprep.subr.bf16.mxu0 0
    %98 = vmatpush1.bf16.msra.mxu0 0
    %99 = vmatprep.subr.bf16.mxu0 0
    %100 = vmatpush1.bf16.msra.mxu0 0
    %101 = vmatprep.subr.bf16.mxu0 0
    %102 = vmatpush1.bf16.msra.mxu0 0
    %103 = vmatprep.subr.bf16.mxu0 0
    %104 = vmatpush1.bf16.msra.mxu0 0
    %105 = vmatprep.mubr.bf16.mxu0 0
    %106 = vmatmul.mubr.bf16.gmra.mrb[0].mxu0 %v71
    %v107 = vpop.f32.mrb[0].mxu0
    %v108 = vadd.f32 0.0, %v107
    %v109 = vpop.f32.mrb[0].mxu0
    %v110 = vpop.f32.mrb[0].mxu0
    %v111 = vadd.f32 0.0, %v110
    %v112 = vpop.f32.mrb[0].mxu0
    %113 = vdwg.mxu0
    %v114 = vadd.f32 %v48, %v108
    %v115 = vadd.f32 %v49, %v111
    %vm116 = vcmask 785408
    %117 = vst.msk [vmem:[#allocation2] sm:$0xff] %vm116, %v114
    %118 = vst.msk [vmem:[#allocation2 + $0x8] sm:$0xff] %vm116, %v115
    // Predicated region
    $region22: #{tpu_custom_call.1} parent=1 // pred_check
      %p119 = pneg %p41
    $region23: #{tpu_custom_call.1} parent=1 // pred_check_branch
      %121 = sbr.rel (%p119) target = $region25
    $region24: #{tpu_custom_call.1} parent=1 // pred_region
      %v122 = vld [vmem:[#allocation2] sm:$0xff]
      %v123 = vld [vmem:[#allocation2 + $0x8] sm:$0xff]
      %v124 = vpack.c.bf16 %v123, %v122
      %v126 = vunpack.c.l.b16 %v124
      %v127 = vunpack.c.h.b16 %v124
      %v128 = vpack.c.b16 %v126, %v126
      %v129 = vpack.c.b16 %v127, %v127
      %vm132 = vcmask 781312
      %133 = vst.msk [vmem:[#allocation8] sm:$0xf] %vm132, %v128
      %134 = vst.msk [vmem:[#allocation8 + $0x4] sm:$0xf] %vm132, %v129
    $region25: #{tpu_custom_call.1} parent=1 // pred_fallthru
      _
    // Predicated region
    $region26: #{tpu_custom_call.1} parent=1 // pred_check
      _
    $region27: #{tpu_custom_call.1} parent=1 // pred_check_branch
      %136 = sbr.rel (0) target = $region29
    $region28: #{tpu_custom_call.1} parent=1 // pred_region
      %s138 = ssub.s32 128, 128
      %139 = vsyncadd [#allocation5], %s138
      %s140 = sshll.u32 [#allocation8], 4
      %s141 = int_to_ptr.vmem [resolvable:$true] %s140
      %146 = dma.vmem_to_hbm [thread:$0]  %s141, 128, %s2, [#allocation5], 64, 64, 4
    $region29: #{tpu_custom_call.1} parent=1 // pred_fallthru
      _
    // Predicated region
    $region30: #{tpu_custom_call.1} parent=1 // pred_check
      _
    $region31: #{tpu_custom_call.1} parent=1 // pred_check_branch
      %148 = sbr.rel (0) target = $region33
    $region32: #{tpu_custom_call.1} parent=1 // pred_region
      %149 = dma.done [#allocation5], 128
    $region33: #{tpu_custom_call.1} parent=1 // pred_fallthru
      _
    %150 = vsyncpa [#allocation4], 1
    %151 = vsyncpa [#allocation7], 1
    %152 = vsyncpa [#allocation5], 1

</llo_original>
